<compile_context>
chip_gen: v6e
topology: v6e:2x2x1
jax: 0.10.0
libtpu: 0.0.40
codegen_flags: <defaults>
</compile_context>

<pallas_src>
import functools

import jax
import jax.numpy as jnp
from jax.experimental import pallas as pl
from jax.experimental.pallas import tpu as pltpu


def _lora_kernel(x_ref, wd_ref, wu_ref, o_ref, down_ref, *, tn, compute_dtype, multi_col):
    # x_ref:    (tm, in_features) tile of the flattened input, ORIGINAL dtype.
    # wd_ref:   (in_features, rank)    full W_down^T (constant index_map -> resident).
    # wu_ref:   (rank, out_padded)     full, scale-folded W_up^T (resident).
    # o_ref:    (tm, tn) output tile.
    # down_ref: (tm, rank) scratch, weight dtype (cached down projection).
    j = pl.program_id(1)

    # The down projection depends only on the row tile: compute it once (j == 0)
    # and reuse it for every out-column tile of this row tile.
    @pl.when(j == 0)
    def _():
        x = x_ref[...].astype(compute_dtype)  # PyTorch: hidden_states.to(weight dtype)
        down = jnp.dot(x, wd_ref[...], preferred_element_type=jnp.float32)
        # Second matmul is done in the weight dtype (PyTorch semantics, 1-pass MXU).
        down_ref[...] = down.astype(compute_dtype)

    if multi_col:
        col = pl.multiple_of(j * tn, tn)
        wu_tile = wu_ref[:, pl.ds(col, tn)]
    else:
        wu_tile = wu_ref[...]

    up = jnp.dot(down_ref[...], wu_tile, preferred_element_type=jnp.float32)
    o_ref[...] = up.astype(o_ref.dtype)


def _round_up(x, m):
    return ((x + m - 1) // m) * m


_CANDIDATE_TM = (1024, 512, 256, 128, 64, 32, 16, 8)
_MIB = 1024 * 1024


def _vmem_policy():
    """Generation-aware (tile budget, scoped vmem limit, max out-column tile)."""
    try:
        cap = pltpu.get_tpu_info().vmem_capacity_bytes
    except Exception:
        cap = 64 * _MIB  # conservative fallback (v7x-sized)
    if cap >= 96 * _MIB:          # v5e / v6e: 128 MiB physical VMEM
        return 80 * _MIB, 96 * _MIB, 2048
    else:                         # v7x: 64 MiB physical VMEM
        return 32 * _MIB, 48 * _MIB, 1024


def _choose_tm(M, in_features, tn, out_padded, rank,
               x_item, w_item, o_item, cast_needed, budget):
    n_col_tiles = max(1, out_padded // tn)

    def vmem_est(tm):
        x_bufs = 2 * tm * in_features * x_item                       # double-buffered x tile
        o_bufs = 2 * tm * tn * o_item                                # double-buffered out tile
        w_bufs = 2 * (in_features * rank + rank * out_padded) * w_item  # resident weights (2 bufs)
        x_cast = (tm * in_features * w_item) if cast_needed else 0   # cast copy of x tile
        down_f32 = tm * rank * 4                                     # f32 MXU result (down)
        down_scr = tm * rank * w_item                                # scratch (weight dtype)
        up_f32 = tm * tn * 4                                         # f32 MXU result (up)
        return x_bufs + o_bufs + w_bufs + x_cast + down_f32 + down_scr + up_f32

    cap = max(8, _round_up(min(M, _CANDIDATE_TM[0]), 8))
    tm = 8
    for cand in _CANDIDATE_TM:
        if cand <= cap and vmem_est(cand) <= budget:
            tm = cand
            break
    # Aim for >= 4 grid steps total (>= 2 per TensorCore on v7x megacore) so the
    # software pipeline actually overlaps DMA with compute.
    while tm >= 256 and pl.cdiv(M, tm) * n_col_tiles < 4:
        tm //= 2
    return tm


def lora_linear(hidden_states, down_weight, up_weight, network_alpha=None):
    """hidden_states: [..., in_features]; down_weight: [rank, in]; up_weight: [out, rank]."""
    orig_dtype = hidden_states.dtype
    compute_dtype = down_weight.dtype
    rank, in_features = down_weight.shape
    out_features = up_weight.shape[0]

    lead_shape = hidden_states.shape[:-1]
    M = 1
    for d in lead_shape:
        M *= d
    # Keep x in its original dtype; the cast happens tile-by-tile inside the kernel.
    x2d = hidden_states.reshape(M, in_features)

    budget, vmem_limit, tn_cap = _vmem_policy()

    # Out-column tile: keep the full width when modest, else a lane-dense tile.
    tn = out_features if out_features <= tn_cap else tn_cap
    out_padded = pl.cdiv(out_features, tn) * tn
    n_col_tiles = out_padded // tn

    # Weights pre-transposed; fold the alpha/rank scale into W_up^T (tiny array).
    wd_t = jnp.transpose(down_weight)   # [in, rank]
    wu_t = jnp.transpose(up_weight)     # [rank, out]
    if network_alpha is not None:
        scale = float(network_alpha) / float(rank)
        wu_t = wu_t * jnp.asarray(scale, dtype=wu_t.dtype)
    if out_padded != out_features:
        wu_t = jnp.pad(wu_t, ((0, 0), (0, out_padded - out_features)))

    x_item = jnp.dtype(orig_dtype).itemsize
    w_item = jnp.dtype(compute_dtype).itemsize
    o_item = jnp.dtype(orig_dtype).itemsize
    cast_needed = jnp.dtype(orig_dtype) != jnp.dtype(compute_dtype)

    tm = _choose_tm(M, in_features, tn, out_padded, rank,
                    x_item, w_item, o_item, cast_needed, budget)

    grid = (pl.cdiv(M, tm), n_col_tiles)

    cost = pl.CostEstimate(
        flops=2 * M * rank * (in_features + out_features),
        transcendentals=0,
        bytes_accessed=(
            M * in_features * x_item
            + M * out_features * o_item
            + (rank * in_features + rank * out_padded) * w_item
        ),
    )

    kernel = functools.partial(
        _lora_kernel, tn=tn, compute_dtype=compute_dtype, multi_col=(n_col_tiles > 1))

    out2d = pl.pallas_call(
        kernel,
        out_shape=jax.ShapeDtypeStruct((M, out_features), orig_dtype),
        grid_spec=pltpu.PrefetchScalarGridSpec(
            num_scalar_prefetch=0,
            grid=grid,
            in_specs=[
                # x tile: constant in j -> resident across the out-column sweep.
                pl.BlockSpec((tm, in_features), lambda i, j: (i, 0)),
                # W_down^T: constant index_map -> fetched once for the whole kernel.
                pl.BlockSpec((in_features, rank), lambda i, j: (0, 0)),
                # W_up^T: fully resident; kernel slices the current column tile.
                pl.BlockSpec((rank, out_padded), lambda i, j: (0, 0)),
            ],
            out_specs=pl.BlockSpec((tm, tn), lambda i, j: (i, j)),
            scratch_shapes=[pltpu.VMEM((tm, rank), compute_dtype)],
        ),
        compiler_params=pltpu.CompilerParams(
            # j must be sequential ("arbitrary") because the down-projection scratch
            # is computed at j == 0 and reused for the remaining column tiles.
            dimension_semantics=("parallel", "arbitrary"),
            vmem_limit_bytes=vmem_limit,
        ),
        cost_estimate=cost,
    )(x2d, wd_t, wu_t)

    return out2d.reshape(*lead_shape, out_features)


def lora_linear_ref(hidden_states, down_weight, up_weight, network_alpha=None):
    orig_dtype = hidden_states.dtype
    x = hidden_states.astype(down_weight.dtype)
    rank = down_weight.shape[0]
    y = x @ down_weight.T
    y = y @ up_weight.T
    if network_alpha is not None:
        y = y * (network_alpha / rank)
    return y.astype(orig_dtype)


if __name__ == "__main__":
    # Small shapes consistent with the module: batch=2, seq=8, hidden(in)=32, out=32, rank=4.
    B, S, in_features, out_features, rank = 2, 8, 32, 32, 4
    network_alpha = 8.0

    key = jax.random.PRNGKey(0)
    kx, kd, ku = jax.random.split(key, 3)

    hidden_states = jax.random.normal(kx, (B, S, in_features), dtype=jnp.float32)

    # down: normal(std = 1/rank) as in the module's __init__.
    down_weight = (1.0 / rank) * jax.random.normal(kd, (rank, in_features), dtype=jnp.float32)
    # Module initializes `up` to zeros; use a deterministic nonzero init here so the
    # kernel's hot path is actually exercised / checkable against the reference.
    up_weight = 0.02 * jax.random.normal(ku, (out_features, rank), dtype=jnp.float32)

    out = lora_linear(hidden_states, down_weight, up_weight, network_alpha)
    out = jax.block_until_ready(out)

    ref = lora_linear_ref(hidden_states, down_weight, up_weight, network_alpha)
    assert out.shape == (B, S, out_features)
    assert out.dtype == hidden_states.dtype
    assert jnp.allclose(out, ref, atol=1e-5, rtol=1e-5), "mismatch vs reference (f32)"

    # Ragged M (B*S = 15, not a multiple of 8/128) exercises the cdiv + edge-mask path.
    hs_ragged = jax.random.normal(kx, (3, 5, in_features), dtype=jnp.float32)
    out2 = jax.block_until_ready(lora_linear(hs_ragged, down_weight, up_weight, network_alpha))
    ref2 = lora_linear_ref(hs_ragged, down_weight, up_weight, network_alpha)
    assert out2.shape == (3, 5, out_features)
    assert jnp.allclose(out2, ref2, atol=1e-5, rtol=1e-5), "mismatch vs reference (ragged M)"

    # bf16 activations with f32 weights exercises the in-kernel dtype cast
    # (module semantics: compute in weight dtype, return in activation dtype).
    hs_bf16 = hidden_states.astype(jnp.bfloat16)
    out3 = jax.block_until_ready(lora_linear(hs_bf16, down_weight, up_weight, network_alpha))
    ref3 = lora_linear_ref(hs_bf16, down_weight, up_weight, network_alpha)
    assert out3.dtype == jnp.bfloat16
    assert jnp.allclose(out3.astype(jnp.float32), ref3.astype(jnp.float32),
                        atol=1e-2, rtol=5e-2), "mismatch vs reference (bf16 in/out)"

    # No network_alpha (scale fold disabled) path.
    out4 = jax.block_until_ready(lora_linear(hidden_states, down_weight, up_weight, None))
    ref4 = lora_linear_ref(hidden_states, down_weight, up_weight, None)
    assert jnp.allclose(out4, ref4, atol=1e-5, rtol=1e-5), "mismatch vs reference (no alpha)"

    print("KERNEL_OK")
</pallas_src>

<mosaic_0001>
module attributes {stable_mosaic.version = 11 : i64} {
  func.func @_lora_kernel(%arg0: i32, %arg1: i32, %arg2: memref<16x32xf32, #tpu.memory_space<vmem>>, %arg3: memref<32x4xf32, #tpu.memory_space<vmem>>, %arg4: memref<4x32xf32, #tpu.memory_space<vmem>>, %arg5: memref<16x32xf32, #tpu.memory_space<vmem>>, %arg6: memref<16x4xf32, #tpu.memory_space<vmem>>) attributes {dimension_semantics = [#tpu.dimension_semantics<parallel>, #tpu.dimension_semantics<arbitrary>], iteration_bounds = array<i64: 1, 1>, scalar_prefetch = 0 : i64, scratch_operands = 1 : i64, tpu.core_type = #tpu.core_type<tc>, window_params = [{transform_indices = @transform_0, window_bounds = array<i64: 16, 32>}, {pipeline_mode = #tpu.pipeline_mode<synchronous>, transform_indices = @transform_1, window_bounds = array<i64: 32, 4>}, {pipeline_mode = #tpu.pipeline_mode<synchronous>, transform_indices = @transform_2, window_bounds = array<i64: 4, 32>}, {transform_indices = @transform_3, window_bounds = array<i64: 16, 32>}]} {
    %c0_i32 = arith.constant 0 : i32
    %0 = arith.cmpi eq, %arg1, %c0_i32 : i32
    %1 = arith.extui %0 : i1 to i32
    %c0_i32_0 = arith.constant 0 : i32
    %2 = arith.cmpi ne, %1, %c0_i32_0 : i32
    scf.if %2 {
      %c0_6 = arith.constant 0 : index
      %c0_7 = arith.constant 0 : index
      %7 = vector.load %arg2[%c0_6, %c0_7] : memref<16x32xf32, #tpu.memory_space<vmem>>, vector<16x32xf32>
      %c0_8 = arith.constant 0 : index
      %c0_9 = arith.constant 0 : index
      %8 = vector.load %arg3[%c0_8, %c0_9] : memref<32x4xf32, #tpu.memory_space<vmem>>, vector<32x4xf32>
      %cst_10 = arith.constant dense<0.000000e+00> : vector<16x4xf32>
      %9 = tpu.matmul %7, %8, %cst_10 {dimension_numbers = #tpu.dot_dimension_numbers<[1], [0], [0], [1], [0, 0, 1, 1], [], []>} : vector<16x32xf32>, vector<32x4xf32>, vector<16x4xf32> -> vector<16x4xf32>
      %c0_11 = arith.constant 0 : index
      %c0_12 = arith.constant 0 : index
      %10 = vector.load %arg6[%c0_11, %c0_12] : memref<16x4xf32, #tpu.memory_space<vmem>>, vector<16x4xf32>
      tpu.vector_store %arg6[%c0_11, %c0_12], %9 {strides = array<i32>} : memref<16x4xf32, #tpu.memory_space<vmem>>, vector<16x4xf32>,
    } else {
    }
    %c0 = arith.constant 0 : index
    %c0_1 = arith.constant 0 : index
    %3 = vector.load %arg4[%c0, %c0_1] : memref<4x32xf32, #tpu.memory_space<vmem>>, vector<4x32xf32>
    %c0_2 = arith.constant 0 : index
    %c0_3 = arith.constant 0 : index
    %4 = vector.load %arg6[%c0_2, %c0_3] : memref<16x4xf32, #tpu.memory_space<vmem>>, vector<16x4xf32>
    %cst = arith.constant dense<0.000000e+00> : vector<16x32xf32>
    %5 = tpu.matmul %4, %3, %cst {dimension_numbers = #tpu.dot_dimension_numbers<[1], [0], [0], [1], [0, 0, 1, 1], [], []>} : vector<16x4xf32>, vector<4x32xf32>, vector<16x32xf32> -> vector<16x32xf32>
    %c0_4 = arith.constant 0 : index
    %c0_5 = arith.constant 0 : index
    %6 = vector.load %arg5[%c0_4, %c0_5] : memref<16x32xf32, #tpu.memory_space<vmem>>, vector<16x32xf32>
    tpu.vector_store %arg5[%c0_4, %c0_5], %5 {strides = array<i32>} : memref<16x32xf32, #tpu.memory_space<vmem>>, vector<16x32xf32>,
    return
  }
  func.func @transform_0(%arg0: i32, %arg1: i32) -> (i32, i32) {
    %c0_i32 = arith.constant 0 : i32
    %c0_i32_0 = arith.constant 0 : i32
    return %arg0, %c0_i32 : i32, i32
  }
  func.func @transform_1(%arg0: i32, %arg1: i32) -> (i32, i32) {
    %c0_i32 = arith.constant 0 : i32
    %c0_i32_0 = arith.constant 0 : i32
    %c0_i32_1 = arith.constant 0 : i32
    return %c0_i32, %c0_i32_0 : i32, i32
  }
  func.func @transform_2(%arg0: i32, %arg1: i32) -> (i32, i32) {
    %c0_i32 = arith.constant 0 : i32
    %c0_i32_0 = arith.constant 0 : i32
    %c0_i32_1 = arith.constant 0 : i32
    return %c0_i32, %c0_i32_0 : i32, i32
  }
  func.func @transform_3(%arg0: i32, %arg1: i32) -> (i32, i32) {
    %c0_i32 = arith.constant 0 : i32
    return %arg0, %arg1 : i32, i32
  }
}

</mosaic_0001>

<llo_original>
// kernel: tpu_custom_call.1
$region0: #{tpu_custom_call.1}
  #allocation0 [shape = 'u32[]', space=smem, size = 0x4, offset = 0x4, fixed_abs, tag = 'smem constant byte address 0x4 - core index']
  #allocation1 [shape = 'u32[144,128]{1,0:T(1,128)}', space=vmem, size = 0x12000, scoped, tag = 'internal scratch']
  #allocation2 [shape = 'f32[16,4]{1,0:T(8,128)}', space=vmem, size = 0x2000, scoped, tag = 'scratch operand']
  %s0 = inlined_call_operand.vmem [shape: f32[16,32], index: 0, kind: input, shape index: {}]
  %s1 = inlined_call_operand.vmem [shape: f32[32,4], index: 1, kind: input, shape index: {}]
  %s2 = inlined_call_operand.vmem [shape: f32[4,32], index: 2, kind: input, shape index: {}]
  %s3 = inlined_call_operand.hbm [shape: f32[16,32], index: 3, kind: output, shape index: {}]
  %s4 = sld [smem:[#allocation0]]
  $region26: #{tpu_custom_call.1} parent=0
    _
  %s6 = ssub.s32 1, %s4
  %s7 = scalar_select 0, %s6, %s4
  $region1: #{tpu_custom_call.1} parent=0
    #allocation3 [shape = 'u8[8192]{0}', space=vmem, size = 0x2000, scoped, tag = 'output window, operand 0, single buffered']
    #allocation4 [shape = 's32[1]{0}', space=sflag, size = 0x4, scoped, tag = 'scoped memory for tpu_custom_call.1']
    %8 = vsyncpa [#allocation4], 0
    // Predicated region
    $region2: #{tpu_custom_call.1} parent=1 // pred_check
      _
    $region3: #{tpu_custom_call.1} parent=1 // pred_check_branch
      %10 = sbr.rel (0) target = $region5
    $region4: #{tpu_custom_call.1} parent=1 // pred_region
      _
    $region5: #{tpu_custom_call.1} parent=1 // pred_fallthru
      _
    // Predicated region
    $region6: #{tpu_custom_call.1} parent=1 // pred_check
      _
    $region7: #{tpu_custom_call.1} parent=1 // pred_check_branch
      %12 = sbr.rel (0) target = $region9
    $region8: #{tpu_custom_call.1} parent=1 // pred_region
      _
    $region9: #{tpu_custom_call.1} parent=1 // pred_fallthru
      _
    // Predicated region
    $region10: #{tpu_custom_call.1} parent=1 // pred_check
      _
    $region11: #{tpu_custom_call.1} parent=1 // pred_check_branch
      %14 = sbr.rel (0) target = $region13
    $region12: #{tpu_custom_call.1} parent=1 // pred_region
      _
    $region13: #{tpu_custom_call.1} parent=1 // pred_fallthru
      _
    %p15 = scmp.eq.s32.totalorder 0, 0
    // Predicated region
    $region14: #{tpu_custom_call.1} parent=1 // pred_check
      %p16 = pneg %p15
    $region15: #{tpu_custom_call.1} parent=1 // pred_check_branch
      %18 = sbr.rel (%p16) target = $region17
    $region16: #{tpu_custom_call.1} parent=1 // pred_region
      %v19 = vld [vmem:[%s0] sm:$0xff]
      %v20 = vld [vmem:[%s0 + $0x8] sm:$0xff]
      %v21 = vld [vmem:[%s1] sm:$0xff]
      %v22 = vld [vmem:[%s1 + $0x8] sm:$0xff]
      %v23 = vld [vmem:[%s1 + $0x10] sm:$0xff]
      %v24 = vld [vmem:[%s1 + $0x18] sm:$0xff]
      %vm25 = vcmask 261120
      %v27 = vsel %vm25, %v19, 0
      %v30 = vsel %vm25, %v20, 0
      %32 = vmatprep.subr.mxu0 0.0
      %33 = vmatpush1.msra.mxu0 0.0
      %34 = vmatprep.subr.mxu0 0.0
      %35 = vmatpush1.msra.mxu0 0.0
      %36 = vmatprep.subr.mxu0 0.0
      %37 = vmatpush1.msra.mxu0 0.0
      %38 = vmatprep.subr.mxu0 0.0
      %39 = vmatpush1.msra.mxu0 0.0
      %40 = vmatprep.subr.mxu0 0.0
      %41 = vmatpush1.msra.mxu0 0.0
      %42 = vmatprep.subr.mxu0 0.0
      %43 = vmatpush1.msra.mxu0 0.0
      %44 = vmatprep.subr.mxu0 0.0
      %45 = vmatpush1.msra.mxu0 0.0
      %46 = vmatprep.subr.mxu0 0.0
      %47 = vmatpush1.msra.mxu0 0.0
      %48 = vmatprep.subr.mxu0 0.0
      %49 = vmatpush1.msra.mxu0 0.0
      %50 = vmatprep.subr.mxu0 0.0
      %51 = vmatpush1.msra.mxu0 0.0
      %52 = vmatprep.subr.mxu0 0.0
      %53 = vmatpush1.msra.mxu0 0.0
      %54 = vmatprep.subr.mxu0 0.0
      %55 = vmatpush1.msra.mxu0 0.0
      %56 = vmatprep.subr.mxu0 0.0
      %57 = vmatpush1.msra.mxu0 %v24
      %58 = vmatprep.subr.mxu0 0.0
      %59 = vmatpush1.msra.mxu0 %v23
      %60 = vmatprep.subr.mxu0 0.0
      %61 = vmatpush1.msra.mxu0 %v22
      %62 = vmatprep.subr.mxu0 0.0
      %63 = vmatpush1.msra.mxu0 %v21
      %64 = vmatprep.subr.mxu0 0.0
      %65 = vmatpush2.msra.mxu0 0.0
      %66 = vmatprep.subr.mxu0 0.0
      %67 = vmatpush2.msra.mxu0 0.0
      %68 = vmatprep.subr.mxu0 0.0
      %69 = vmatpush2.msra.mxu0 0.0
      %70 = vmatprep.subr.mxu0 0.0
      %71 = vmatpush2.msra.mxu0 0.0
      %72 = vmatprep.subr.mxu0 0.0
      %73 = vmatpush2.msra.mxu0 0.0
      %74 = vmatprep.subr.mxu0 0.0
      %75 = vmatpush2.msra.mxu0 0.0
      %76 = vmatprep.subr.mxu0 0.0
      %77 = vmatpush2.msra.mxu0 0.0
      %78 = vmatprep.subr.mxu0 0.0
      %79 = vmatpush2.msra.mxu0 0.0
      %80 = vmatprep.subr.mxu0 0.0
      %81 = vmatpush2.msra.mxu0 0.0
      %82 = vmatprep.subr.mxu0 0.0
      %83 = vmatpush2.msra.mxu0 0.0
      %84 = vmatprep.subr.mxu0 0.0
      %85 = vmatpush2.msra.mxu0 0.0
      %86 = vmatprep.subr.mxu0 0.0
      %87 = vmatpush2.msra.mxu0 0.0
      %88 = vmatprep.subr.mxu0 0.0
      %89 = vmatpush2.msra.mxu0 0.0
      %90 = vmatprep.subr.mxu0 0.0
      %91 = vmatpush2.msra.mxu0 0.0
      %92 = vmatprep.subr.mxu0 0.0
      %93 = vmatpush2.msra.mxu0 0.0
      %94 = vmatprep.subr.mxu0 0.0
      %95 = vmatpush2.msra.mxu0 0.0
      %96 = vmatprep.mubr.f32.mxu0 0.0
      %97 = vmatmul.mubr.f32.gmra.mxu0 %v27
      %v98 = vpop.f32.mrf.mxu0
      %v99 = vadd.f32 0.0, %v98
      %v100 = vpop.f32.mrf.mxu0
      %101 = vmatprep.mubr.f32.mxu0 0.0
      %102 = vmatmul.mubr.f32.gmra.mxu0 %v30
      %v103 = vpop.f32.mrf.mxu0
      %v104 = vadd.f32 0.0, %v103
      %v105 = vpop.f32.mrf.mxu0
      %106 = vdwg.mxu0
      %vm107 = vcmask 31744
      %108 = vst.msk [vmem:[#allocation2] sm:$0xff] %vm107, %v99
      %109 = vst.msk [vmem:[#allocation2 + $0x8] sm:$0xff] %vm107, %v104
    $region17: #{tpu_custom_call.1} parent=1 // pred_fallthru
      _
    %v110 = vld [vmem:[%s2] sm:$0xf]
    %v111 = vld [vmem:[#allocation2] sm:$0xff]
    %v112 = vld [vmem:[#allocation2 + $0x8] sm:$0xff]
    %vm113 = vcmask 31744
    %v115 = vsel %vm113, %v111, 0
    %v118 = vsel %vm113, %v112, 0
    %vm120 = vcmask 1043456
    %v122 = vsel %vm120, %v110, 0
    %124 = vmatprep.subr.mxu0 0.0
    %125 = vmatpush1.msra.mxu0 0.0
    %126 = vmatprep.subr.mxu0 0.0
    %127 = vmatpush1.msra.mxu0 0.0
    %128 = vmatprep.subr.mxu0 0.0
    %129 = vmatpush1.msra.mxu0 0.0
    %130 = vmatprep.subr.mxu0 0.0
    %131 = vmatpush1.msra.mxu0 0.0
    %132 = vmatprep.subr.mxu0 0.0
    %133 = vmatpush1.msra.mxu0 0.0
    %134 = vmatprep.subr.mxu0 0.0
    %135 = vmatpush1.msra.mxu0 0.0
    %136 = vmatprep.subr.mxu0 0.0
    %137 = vmatpush1.msra.mxu0 0.0
    %138 = vmatprep.subr.mxu0 0.0
    %139 = vmatpush1.msra.mxu0 0.0
    %140 = vmatprep.subr.mxu0 0.0
    %141 = vmatpush1.msra.mxu0 0.0
    %142 = vmatprep.subr.mxu0 0.0
    %143 = vmatpush1.msra.mxu0 0.0
    %144 = vmatprep.subr.mxu0 0.0
    %145 = vmatpush1.msra.mxu0 0.0
    %146 = vmatprep.subr.mxu0 0.0
    %147 = vmatpush1.msra.mxu0 0.0
    %148 = vmatprep.subr.mxu0 0.0
    %149 = vmatpush1.msra.mxu0 0.0
    %150 = vmatprep.subr.mxu0 0.0
    %151 = vmatpush1.msra.mxu0 0.0
    %152 = vmatprep.subr.mxu0 0.0
    %153 = vmatpush1.msra.mxu0 0.0
    %154 = vmatprep.subr.mxu0 0.0
    %155 = vmatpush1.msra.mxu0 %v122
    %156 = vmatprep.subr.mxu0 0.0
    %157 = vmatpush2.msra.mxu0 0.0
    %158 = vmatprep.subr.mxu0 0.0
    %159 = vmatpush2.msra.mxu0 0.0
    %160 = vmatprep.subr.mxu0 0.0
    %161 = vmatpush2.msra.mxu0 0.0
    %162 = vmatprep.subr.mxu0 0.0
    %163 = vmatpush2.msra.mxu0 0.0
    %164 = vmatprep.subr.mxu0 0.0
    %165 = vmatpush2.msra.mxu0 0.0
    %166 = vmatprep.subr.mxu0 0.0
    %167 = vmatpush2.msra.mxu0 0.0
    %168 = vmatprep.subr.mxu0 0.0
    %169 = vmatpush2.msra.mxu0 0.0
    %170 = vmatprep.subr.mxu0 0.0
    %171 = vmatpush2.msra.mxu0 0.0
    %172 = vmatprep.subr.mxu0 0.0
    %173 = vmatpush2.msra.mxu0 0.0
    %174 = vmatprep.subr.mxu0 0.0
    %175 = vmatpush2.msra.mxu0 0.0
    %176 = vmatprep.subr.mxu0 0.0
    %177 = vmatpush2.msra.mxu0 0.0
    %178 = vmatprep.subr.mxu0 0.0
    %179 = vmatpush2.msra.mxu0 0.0
    %180 = vmatprep.subr.mxu0 0.0
    %181 = vmatpush2.msra.mxu0 0.0
    %182 = vmatprep.subr.mxu0 0.0
    %183 = vmatpush2.msra.mxu0 0.0
    %184 = vmatprep.subr.mxu0 0.0
    %185 = vmatpush2.msra.mxu0 0.0
    %186 = vmatprep.subr.mxu0 0.0
    %187 = vmatpush2.msra.mxu0 0.0
    %188 = vmatprep.mubr.f32.mxu0 0.0
    %189 = vmatmul.mubr.f32.gmra.mxu0 %v115
    %v190 = vpop.f32.mrf.mxu0
    %v191 = vadd.f32 0.0, %v190
    %v192 = vpop.f32.mrf.mxu0
    %193 = vmatprep.mubr.f32.mxu0 0.0
    %194 = vmatmul.mubr.f32.gmra.mxu0 %v118
    %v195 = vpop.f32.mrf.mxu0
    %v196 = vadd.f32 0.0, %v195
    %v197 = vpop.f32.mrf.mxu0
    %198 = vdwg.mxu0
    %vm199 = vcmask 261120
    %200 = vst.msk [vmem:[#allocation3] sm:$0xff] %vm199, %v191
    %201 = vst.msk [vmem:[#allocation3 + $0x8] sm:$0xff] %vm199, %v196
    // Predicated region
    $region18: #{tpu_custom_call.1} parent=1 // pred_check
      _
    $region19: #{tpu_custom_call.1} parent=1 // pred_check_branch
      %203 = sbr.rel (0) target = $region21
    $region20: #{tpu_custom_call.1} parent=1 // pred_region
      %s205 = ssub.s32 256, 256
      %206 = vsyncadd [#allocation4], %s205
      %s207 = sshll.u32 [#allocation3], 4
      %s208 = int_to_ptr.vmem [resolvable:$true] %s207
      %213 = dma.vmem_to_hbm [thread:$0]  %s208, 256, %s3, [#allocation4], 128, 128, 8
    $region21: #{tpu_custom_call.1} parent=1 // pred_fallthru
      _
    // Predicated region
    $region22: #{tpu_custom_call.1} parent=1 // pred_check
      _
    $region23: #{tpu_custom_call.1} parent=1 // pred_check_branch
      %215 = sbr.rel (0) target = $region25
    $region24: #{tpu_custom_call.1} parent=1 // pred_region
      %216 = dma.done [#allocation4], 256
    $region25: #{tpu_custom_call.1} parent=1 // pred_fallthru
      _
    %217 = vsyncpa [#allocation4], 1

</llo_original>
